<compile_context>
chip_gen: v5e
topology: v5e:2x2
jax: 0.10.0
libtpu: 0.0.40
codegen_flags: <defaults>
</compile_context>

<pallas_src>
import functools

import jax
import jax.numpy as jnp
from jax import lax
from jax.experimental import pallas as pl
from jax.experimental.pallas import tpu as pltpu


def convbn_silu_kernel(w_ref, p_ref, b_ref, o_ref):
    # (Cout, Kdim) @ (Kdim, tn) on the MXU, f32 accumulation.
    acc = jnp.dot(w_ref[...], p_ref[...], preferred_element_type=jnp.float32)
    # Folded BatchNorm (eval mode): scale already folded into the weight.
    y = acc + b_ref[...]                      # (Cout, tn) + (Cout, 1)
    # SiLU: y * sigmoid(y)  (the exp/logistic goes to the EUP slot)
    o_ref[...] = (y * jax.nn.sigmoid(y)).astype(o_ref.dtype)


def _tpu_kind():
    try:
        return jax.devices()[0].device_kind.lower()
    except Exception:
        return ""


@functools.partial(jax.jit, static_argnames=("ksize", "stride"))
def my_model_forward(x, weight, gamma, beta, running_mean, running_var,
                     ksize, stride):
    """Forward of MyModel: SiLU(BN(Conv2d(x))).  x is NCHW, returns NCHW."""
    n, cin, h, w = x.shape
    cout = weight.shape[0]
    pad = (ksize - 1) // 2          # PyTorch-style padding (odd ksize only)
    eps = 1e-6                      # module uses BatchNorm2d(eps=1e-06)

    # --- fold BN (eval mode): scale into the weight rows; bias is (Cout, 1).
    scale = gamma / jnp.sqrt(running_var + eps)                       # (Cout,)
    kdim = cin * ksize * ksize
    w_mat = weight.reshape(cout, kdim) * scale[:, None]               # f32
    bias = (beta - running_mean * scale)[:, None].astype(jnp.float32)

    # --- im2col as one fused XLA gather, computed in bf16 to halve the HBM
    #     traffic of the dominant operand.  Output channel order is
    #     (c, kh, kw), matching weight.reshape(Cout, Cin*K*K) above.
    patches = lax.conv_general_dilated_patches(
        x.astype(jnp.bfloat16), filter_shape=(ksize, ksize),
        window_strides=(stride, stride), padding=[(pad, pad), (pad, pad)],
        dimension_numbers=("NCHW", "OIHW", "NCHW"))
    _, _, ho, wo = patches.shape
    l = ho * wo
    patches = patches.reshape(n, kdim, l)          # free reshape, no copy

    # --- sublane-align the contraction dim (bf16 packs 16 sublanes / vreg).
    kdim_pad = ((kdim + 15) // 16) * 16
    if kdim_pad != kdim:
        patches = jnp.pad(patches, ((0, 0), (0, kdim_pad - kdim), (0, 0)))
        w_mat = jnp.pad(w_mat, ((0, 0), (0, kdim_pad - kdim)))
    w_mat = w_mat.astype(jnp.bfloat16)

    # --- lane-tile selection: tn scales inversely with kdim under a
    #     per-generation VMEM budget for the double-buffered tiles.
    kind = _tpu_kind()
    is_v7x = ("v7" in kind) or ("7x" in kind)
    tile_budget = (24 << 20) if is_v7x else (48 << 20)   # bytes for tiles
    vmem_ceiling = (56 << 20) if is_v7x else (100 << 20)

    lane = 128
    bytes_per_col = 2 * (kdim_pad * 2 + cout * 4)   # 2 bufs: bf16 in, f32 out
    tn_budget = max(512, min(32768,
                             (tile_budget // bytes_per_col) // lane * lane))
    if is_v7x and n == 1 and l > 2048:
        # v7x has 2 TensorCores: force >= 2 parallel grid steps.
        tn_budget = min(tn_budget, (pl.cdiv(l, 2) + lane - 1) // lane * lane)
    tn = l if tn_budget >= l else tn_budget          # full-dim block if tiny
    grid = (n, pl.cdiv(l, tn))

    tile_bytes = (2 * kdim_pad * tn * 2      # double-buffered bf16 patch tile
                  + 2 * cout * tn * 4        # double-buffered f32 out tile
                  + 2 * cout * kdim_pad * 2  # resident weight
                  + 2 * cout * 4)            # resident bias
    vmem_limit = int(min(vmem_ceiling, max(tile_bytes + (4 << 20), 16 << 20)))

    cost = pl.CostEstimate(
        flops=2 * n * l * kdim_pad * cout + 4 * n * l * cout,
        transcendentals=n * l * cout,
        bytes_accessed=(n * kdim_pad * l * 2 + cout * kdim_pad * 2
                        + cout * 4 + n * cout * l * 4),
    )

    out = pl.pallas_call(
        convbn_silu_kernel,
        out_shape=jax.ShapeDtypeStruct((n, cout, l), jnp.float32),
        grid_spec=pltpu.PrefetchScalarGridSpec(
            num_scalar_prefetch=0,
            grid=grid,
            in_specs=[
                # folded weight, resident across the whole grid
                pl.BlockSpec((cout, kdim_pad), lambda b, i: (0, 0)),
                # one (Kdim, tn) patch tile of batch image b
                pl.BlockSpec((pl.Squeezed(), kdim_pad, tn),
                             lambda b, i: (b, 0, i)),
                # bias column, resident
                pl.BlockSpec((cout, 1), lambda b, i: (0, 0)),
            ],
            out_specs=pl.BlockSpec((pl.Squeezed(), cout, tn),
                                   lambda b, i: (b, 0, i)),
        ),
        compiler_params=pltpu.CompilerParams(
            dimension_semantics=("parallel", "parallel"),
            vmem_limit_bytes=vmem_limit),
        cost_estimate=cost,
    )(w_mat, patches, bias)

    # (N, Cout, Ho*Wo) -> (N, Cout, Ho, Wo): free reshape, no transpose.
    return out.reshape(n, cout, ho, wo)


def reference_forward(x, weight, gamma, beta, running_mean, running_var,
                      ksize, stride):
    pad = (ksize - 1) // 2
    eps = 1e-6
    conv = lax.conv_general_dilated(
        x, weight, window_strides=(stride, stride),
        padding=[(pad, pad), (pad, pad)],
        dimension_numbers=("NCHW", "OIHW", "NCHW"))
    s = (gamma / jnp.sqrt(running_var + eps)).reshape(1, -1, 1, 1)
    b = (beta - running_mean * gamma / jnp.sqrt(running_var + eps)).reshape(
        1, -1, 1, 1)
    y = conv * s + b
    return y * jax.nn.sigmoid(y)


if __name__ == "__main__":
    # Shapes consistent with the module's driver (x = randn(1, 3, 24, 24));
    # batch=2 additionally exercises the batched grid axis.
    N, Cin, H, W = 2, 3, 24, 24
    Cout, K, STRIDE = 8, 3, 1

    key = jax.random.PRNGKey(0)
    kx, kw, kg, kb, km, kv = jax.random.split(key, 6)

    x = jax.random.normal(kx, (N, Cin, H, W), dtype=jnp.float32)
    weight = jax.random.normal(kw, (Cout, Cin, K, K), dtype=jnp.float32) * 0.1
    gamma = 1.0 + 0.1 * jax.random.normal(kg, (Cout,), dtype=jnp.float32)
    beta = 0.1 * jax.random.normal(kb, (Cout,), dtype=jnp.float32)
    running_mean = 0.1 * jax.random.normal(km, (Cout,), dtype=jnp.float32)
    running_var = jnp.abs(
        1.0 + 0.1 * jax.random.normal(kv, (Cout,), dtype=jnp.float32))

    out = my_model_forward(x, weight, gamma, beta, running_mean, running_var,
                           ksize=K, stride=STRIDE)
    out = jax.block_until_ready(out)

    ref = reference_forward(x, weight, gamma, beta, running_mean, running_var,
                            ksize=K, stride=STRIDE)
    assert out.shape == (N, Cout, H, W), out.shape
    # bf16 MXU operands: tolerance relaxed vs. the f32 path (per perf review).
    assert jnp.allclose(out, ref, atol=3e-2, rtol=3e-2), "mismatch vs reference"

    print("KERNEL_OK")
</pallas_src>

<mosaic_0001>
module attributes {stable_mosaic.version = 11 : i64} {
  func.func @convbn_silu_kernel(%arg0: i32, %arg1: i32, %arg2: memref<8x32xbf16, #tpu.memory_space<vmem>>, %arg3: memref<1x32x576xbf16, #tpu.memory_space<vmem>>, %arg4: memref<8x1xf32, #tpu.memory_space<vmem>>, %arg5: memref<1x8x576xf32, #tpu.memory_space<vmem>>) attributes {dimension_semantics = [#tpu.dimension_semantics<parallel>, #tpu.dimension_semantics<parallel>], iteration_bounds = array<i64: 2, 1>, scalar_prefetch = 0 : i64, scratch_operands = 0 : i64, tpu.core_type = #tpu.core_type<tc>, window_params = [{pipeline_mode = #tpu.pipeline_mode<synchronous>, transform_indices = @transform_0, window_bounds = array<i64: 8, 32>}, {transform_indices = @transform_1, window_bounds = array<i64: 1, 32, 576>}, {pipeline_mode = #tpu.pipeline_mode<synchronous>, transform_indices = @transform_2, window_bounds = array<i64: 8, 1>}, {transform_indices = @transform_3, window_bounds = array<i64: 1, 8, 576>}]} {
    %c0 = arith.constant 0 : index
    %c0_0 = arith.constant 0 : index
    %0 = vector.load %arg2[%c0, %c0_0] : memref<8x32xbf16, #tpu.memory_space<vmem>>, vector<8x32xbf16>
    %c0_1 = arith.constant 0 : index
    %c0_2 = arith.constant 0 : index
    %c0_3 = arith.constant 0 : index
    %1 = vector.load %arg3[%c0_1, %c0_2, %c0_3] : memref<1x32x576xbf16, #tpu.memory_space<vmem>>, vector<1x32x576xbf16>
    %2 = vector.shape_cast %1 : vector<1x32x576xbf16> to vector<32x576xbf16>
    %cst = arith.constant dense<0.000000e+00> : vector<8x576xf32>
    %3 = tpu.matmul %0, %2, %cst {dimension_numbers = #tpu.dot_dimension_numbers<[1], [0], [0], [1], [0, 0, 1, 1], [], []>} : vector<8x32xbf16>, vector<32x576xbf16>, vector<8x576xf32> -> vector<8x576xf32>
    %c0_4 = arith.constant 0 : index
    %c0_5 = arith.constant 0 : index
    %4 = vector.load %arg4[%c0_4, %c0_5] : memref<8x1xf32, #tpu.memory_space<vmem>>, vector<8x1xf32>
    %5 = vector.broadcast %4 : vector<8x1xf32> to vector<8x576xf32>
    %6 = arith.addf %3, %5 : vector<8x576xf32>
    %7 = arith.negf %6 : vector<8x576xf32>
    %8 = math.exp %7 : vector<8x576xf32>
    %cst_6 = arith.constant 1.000000e+00 : f32
    %9 = vector.broadcast %cst_6 : f32 to vector<8x576xf32>
    %10 = arith.addf %9, %8 : vector<8x576xf32>
    %11 = arith.divf %9, %10 : vector<8x576xf32>
    %12 = arith.mulf %6, %11 : vector<8x576xf32>
    %c0_7 = arith.constant 0 : index
    %c0_8 = arith.constant 0 : index
    %c0_9 = arith.constant 0 : index
    %13 = vector.load %arg5[%c0_7, %c0_8, %c0_9] : memref<1x8x576xf32, #tpu.memory_space<vmem>>, vector<1x8x576xf32>
    %14 = vector.shape_cast %13 : vector<1x8x576xf32> to vector<8x576xf32>
    %15 = vector.shape_cast %12 : vector<8x576xf32> to vector<1x8x576xf32>
    tpu.vector_store %arg5[%c0_7, %c0_8, %c0_9], %15 {strides = array<i32>} : memref<1x8x576xf32, #tpu.memory_space<vmem>>, vector<1x8x576xf32>,
    return
  }
  func.func @transform_0(%arg0: i32, %arg1: i32) -> (i32, i32) {
    %c0_i32 = arith.constant 0 : i32
    %c0_i32_0 = arith.constant 0 : i32
    %c0_i32_1 = arith.constant 0 : i32
    return %c0_i32, %c0_i32_0 : i32, i32
  }
  func.func @transform_1(%arg0: i32, %arg1: i32) -> (i32, i32, i32) {
    %c0_i32 = arith.constant 0 : i32
    %c0_i32_0 = arith.constant 0 : i32
    return %arg0, %c0_i32, %arg1 : i32, i32, i32
  }
  func.func @transform_2(%arg0: i32, %arg1: i32) -> (i32, i32) {
    %c0_i32 = arith.constant 0 : i32
    %c0_i32_0 = arith.constant 0 : i32
    %c0_i32_1 = arith.constant 0 : i32
    return %c0_i32, %c0_i32_0 : i32, i32
  }
  func.func @transform_3(%arg0: i32, %arg1: i32) -> (i32, i32, i32) {
    %c0_i32 = arith.constant 0 : i32
    %c0_i32_0 = arith.constant 0 : i32
    return %arg0, %c0_i32, %arg1 : i32, i32, i32
  }
}

</mosaic_0001>

<llo_original>
// kernel: my_model_forward.1
$region0: #{my_model_forward.1}
  #allocation0 [shape = 'u32[]', space=smem, size = 0x4, offset = 0x4, fixed_abs, tag = 'smem constant byte address 0x4 - core index']
  #allocation1 [shape = 'u32[72,128]{1,0:T(1,128)}', space=vmem, size = 0x9000, scoped, tag = 'internal scratch']
  %s0 = inlined_call_operand.vmem [shape: bf16[8,32], index: 0, kind: input, shape index: {}]
  %s1 = inlined_call_operand.vmem [shape: bf16[2,32,576], index: 1, kind: input, shape index: {}]
  %s2 = inlined_call_operand.vmem [shape: f32[8,1], index: 2, kind: input, shape index: {}]
  %s3 = inlined_call_operand.vmem [shape: f32[2,8,576], index: 3, kind: output, shape index: {}]
  %s4 = sld [smem:[#allocation0]]
  $region45: #{my_model_forward.1} parent=0
    _
  %s6 = ssub.s32 1, %s4
  %s7 = scalar_select 0, %s6, %s4
  loop: start=0, step=1, limit=4
  $region2: #{my_model_forward.1} parent=0 // loop_pre_header
    _
  $region3: #{my_model_forward.1} parent=0 // loop_header
    %s9 = sphi 0, %s13
    %p10 = scmp.ge.s32.totalorder %s9, 4
    %s16 = sphi 0, %s28
    %s17 = sphi 0, %s24
    %s18 = sphi 0, %s16
    %s19 = sphi 0, %s17
    %s20 = sphi 0, %s18
    %s21 = sphi 0, %s19
    %s29 = sphi 0, %s29
    %s31 = sphi 0, %s29
    %s32 = sphi 0, %s31
    %s46 = sphi 0, %s32
    %s54 = sphi 0, %s56
    %s57 = sphi 0, %s54
    %s58 = sphi 0, %s57
    %s74 = sphi 0, %s58
    %s78 = sphi 0, %s78
    %s80 = sphi 0, %s78
    %s81 = sphi 0, %s80
    %s95 = sphi 0, %s81
    %s103 = sphi 0, %s105
    %s106 = sphi 0, %s103
    %s107 = sphi 0, %s106
    %s123 = sphi 0, %s107
  $region4: #{my_model_forward.1} parent=0 // loop_header_branch
    %12 = sbr.rel (%p10) target = $region8
  $region5: #{my_model_forward.1} parent=0 // loop_body
    %s14 = ssub.s32 %s9, 1
    %s15 = ssub.s32 %s9, 2
    %s22 = sadd.s32 1, %s17
    %p23 = scmp.ge.s32.totalorder %s22, 1
    %s24 = scalar_select %p23, 0, %s22
    %s25 = sadd.s32 1, %s16
    %s26 = scalar_select %p23, %s25, %s16
    %p27 = scmp.ge.s32.totalorder %s26, 2
    %s28 = scalar_select %p27, 0, %s26
    %s30 = sadd.s32 %s29, 1
    %p33 = scmp.eq.s32.totalorder %s9, 1
    %p34 = scmp.ne.s32.totalorder %s29, %s31
    %p35 = scmp.eq.s32.totalorder %s9, 0
    %p36 = por %p34, %p35
    %p37 = scmp.ne.s32.totalorder %s29, %s31
    %p38 = scmp.eq.s32.totalorder %s14, 1
    %p39 = por %p37, %p38
    %p40 = scmp.ne.s32.totalorder %s31, %s32
    %p41 = scmp.eq.s32.totalorder %s14, 0
    %p42 = por %p40, %p41
    %p43 = scmp.ne.s32.totalorder %s31, %s32
    %p44 = scmp.eq.s32.totalorder %s15, 1
    %p45 = por %p43, %p44
    %p47 = scmp.ne.s32.totalorder %s32, %s46
    %p48 = scmp.eq.s32.totalorder %s15, 0
    %p49 = por %p47, %p48
    %s50 = ssub.s32 %s16, %s28
    %s51 = ssub.s32 %s17, %s24
    %s52 = sor.u32 %s50, %s51
    %p53 = scmp.eq.s32.totalorder %s52, 0
    %s55 = sadd.s32 %s54, 1
    %s56 = scalar_select %p53, %s54, %s55
    %p59 = pneg %p53
    %p60 = scmp.eq.s32.totalorder %s9, 1
    %p61 = por %p59, %p60
    %p62 = scmp.ne.s32.totalorder %s54, %s57
    %p63 = scmp.eq.s32.totalorder %s9, 0
    %p64 = por %p62, %p63
    %p65 = scmp.ne.s32.totalorder %s54, %s57
    %p66 = scmp.eq.s32.totalorder %s14, 1
    %p67 = por %p65, %p66
    %p68 = scmp.ne.s32.totalorder %s57, %s58
    %p69 = scmp.eq.s32.totalorder %s14, 0
    %p70 = por %p68, %p69
    %p71 = scmp.ne.s32.totalorder %s57, %s58
    %p72 = scmp.eq.s32.totalorder %s15, 1
    %p73 = por %p71, %p72
    %p75 = scmp.ne.s32.totalorder %s58, %s74
    %p76 = scmp.eq.s32.totalorder %s15, 0
    %p77 = por %p75, %p76
    %s79 = sadd.s32 %s78, 1
    %p82 = scmp.eq.s32.totalorder %s9, 1
    %p83 = scmp.ne.s32.totalorder %s78, %s80
    %p84 = scmp.eq.s32.totalorder %s9, 0
    %p85 = por %p83, %p84
    %p86 = scmp.ne.s32.totalorder %s78, %s80
    %p87 = scmp.eq.s32.totalorder %s14, 1
    %p88 = por %p86, %p87
    %p89 = scmp.ne.s32.totalorder %s80, %s81
    %p90 = scmp.eq.s32.totalorder %s14, 0
    %p91 = por %p89, %p90
    %p92 = scmp.ne.s32.totalorder %s80, %s81
    %p93 = scmp.eq.s32.totalorder %s15, 1
    %p94 = por %p92, %p93
    %p96 = scmp.ne.s32.totalorder %s81, %s95
    %p97 = scmp.eq.s32.totalorder %s15, 0
    %p98 = por %p96, %p97
    %s99 = ssub.s32 %s16, %s28
    %s100 = ssub.s32 %s17, %s24
    %s101 = sor.u32 %s99, %s100
    %p102 = scmp.eq.s32.totalorder %s101, 0
    %s104 = sadd.s32 %s103, 1
    %s105 = scalar_select %p102, %s103, %s104
    %p108 = pneg %p102
    %p109 = scmp.eq.s32.totalorder %s9, 1
    %p110 = por %p108, %p109
    %p111 = scmp.ne.s32.totalorder %s103, %s106
    %p112 = scmp.eq.s32.totalorder %s9, 0
    %p113 = por %p111, %p112
    %p114 = scmp.ne.s32.totalorder %s103, %s106
    %p115 = scmp.eq.s32.totalorder %s14, 1
    %p116 = por %p114, %p115
    %p117 = scmp.ne.s32.totalorder %s106, %s107
    %p118 = scmp.eq.s32.totalorder %s14, 0
    %p119 = por %p117, %p118
    %p120 = scmp.ne.s32.totalorder %s106, %s107
    %p121 = scmp.eq.s32.totalorder %s15, 1
    %p122 = por %p120, %p121
    %p124 = scmp.ne.s32.totalorder %s107, %s123
    %p125 = scmp.eq.s32.totalorder %s15, 0
    %p126 = por %p124, %p125
    %p127 = scmp.le.s32.totalorder 1, %s9
    %p128 = scmp.lt.s32.totalorder %s9, 3
    %p129 = pnand %p127, %p128
    %p130 = pneg %p129
    // Predicated region
    $region9: #{my_model_forward.1} parent=5 // pred_check
      _
    $region10: #{my_model_forward.1} parent=5 // pred_check_branch
      %132 = sbr.rel (%p129) target = $region12
    $region11: #{my_model_forward.1} parent=5 // pred_region
      %s133 = ssub.s32 %s9, 1
      // Predicated region
      $region13: #{my_model_forward.1} parent=11 // pred_check
        %p134 = pneg %p42
      $region14: #{my_model_forward.1} parent=11 // pred_check_branch
        %136 = sbr.rel (%p134) target = $region16
      $region15: #{my_model_forward.1} parent=11 // pred_region
        _
      $region16: #{my_model_forward.1} parent=11 // pred_fallthru
        _
      // Predicated region
      $region17: #{my_model_forward.1} parent=11 // pred_check
        %p137 = pneg %p91
      $region18: #{my_model_forward.1} parent=11 // pred_check_branch
        %139 = sbr.rel (%p137) target = $region20
      $region19: #{my_model_forward.1} parent=11 // pred_region
        _
      $region20: #{my_model_forward.1} parent=11 // pred_fallthru
        _
    $region12: #{my_model_forward.1} parent=5 // pred_fallthru
      _
    %p140 = scmp.lt.s32.totalorder %s9, 2
    // Predicated region
    $region21: #{my_model_forward.1} parent=5 // pred_check
      %p141 = pneg %p140
    $region22: #{my_model_forward.1} parent=5 // pred_check_branch
      %143 = sbr.rel (%p141) target = $region24
    $region23: #{my_model_forward.1} parent=5 // pred_region
      // Predicated region
      $region25: #{my_model_forward.1} parent=23 // pred_check
        %p144 = pneg %p64
      $region26: #{my_model_forward.1} parent=23 // pred_check_branch
        %146 = sbr.rel (%p144) target = $region28
      $region27: #{my_model_forward.1} parent=23 // pred_region
        %s147 = smul.u32 5, %s17
        %p148 = scmp.lt.s32.totalorder %s16, 1
        %s149 = scalar_select %p148, %s16, 1
        %p150 = scmp.lt.s32.totalorder %s147, 4
        %s151 = scalar_select %p150, %s147, 4
        %s152 = smul.addr %s149, 20
        %s153 = sadd.s32 %s151, %s152
        %s154 = smul.addr %s153, 4
        %s155 = scalar_lea.vmem %s1, %s154
        %s156 = smul.u32 5, %s17
      $region28: #{my_model_forward.1} parent=23 // pred_fallthru
        _
    $region24: #{my_model_forward.1} parent=5 // pred_fallthru
      _
    %p157 = scmp.le.s32.totalorder 1, %s9
    %p158 = scmp.lt.s32.totalorder %s9, 3
    %p159 = pnand %p157, %p158
    %p160 = pneg %p159
    // Predicated region
    $region29: #{my_model_forward.1} parent=5 // pred_check
      _
    $region30: #{my_model_forward.1} parent=5 // pred_check_branch
      %162 = sbr.rel (%p159) target = $region32
    $region31: #{my_model_forward.1} parent=5 // pred_region
      %s163 = ssub.s32 %s9, 1
      %p164 = pneg %p42
      %p165 = pneg %p39
      %s166 = smul.u32 5, %s19
      %p167 = scmp.lt.s32.totalorder %s18, 1
      %s168 = scalar_select %p167, %s18, 1
      %p169 = scmp.lt.s32.totalorder %s166, 4
      %s170 = scalar_select %p169, %s166, 4
      %s171 = smul.addr %s168, 20
      %s172 = sadd.s32 %s170, %s171
      %s173 = smul.addr %s172, 4
      %s174 = scalar_lea.vmem %s1, %s173
      %p175 = pneg %p70
      %p176 = pneg %p67
      %p177 = pneg %p91
      %p178 = pneg %p88
      %p179 = pneg %p119
      %p180 = pneg %p116
      %s181 = smul.u32 5, %s19
      %p182 = scmp.lt.s32.totalorder %s18, 1
      %s183 = scalar_select %p182, %s18, 1
      %p184 = scmp.lt.s32.totalorder %s181, 4
      %s185 = scalar_select %p184, %s181, 4
      %s186 = smul.addr %s183, 5
      %s187 = sadd.s32 %s185, %s186
      %s188 = smul.addr %s187, 8
      %s189 = scalar_lea.vmem %s3, %s188
      %s190 = smul.u32 5, %s19
      %p191 = scmp.lt.s32.totalorder %s18, 1
      %s192 = scalar_select %p191, %s18, 1
      %p193 = scmp.lt.s32.totalorder %s190, 4
      %s194 = scalar_select %p193, %s190, 4
      %s195 = smul.addr %s192, 20
      %s196 = sadd.s32 %s194, %s195
      %s197 = smul.addr %s196, 4
      %s198 = scalar_lea.vmem %s1, %s197
      %s199 = smul.u32 5, %s19
      %s200 = smul.u32 5, %s19
      %p201 = scmp.lt.s32.totalorder %s18, 1
      %s202 = scalar_select %p201, %s18, 1
      %p203 = scmp.lt.s32.totalorder %s200, 4
      %s204 = scalar_select %p203, %s200, 4
      %s205 = smul.addr %s202, 5
      %s206 = sadd.s32 %s204, %s205
      %s207 = smul.addr %s206, 8
      %s208 = scalar_lea.vmem %s3, %s207
      %s209 = smul.u32 5, %s19
      %v211 = vld [vmem:[%s0] sm:$0xf]
      %v212 = vld [vmem:[%s198] sm:$0xff]
      %v213 = vld [vmem:[%s198 + $0x8] sm:$0xff]
      %v214 = vld [vmem:[%s198 + $0x10] sm:$0xf]
      %v215 = vld [vmem:[%s198 + $0x14] sm:$0xff]
      %v216 = vld [vmem:[%s198 + $0x1c] sm:$0xff]
      %v217 = vld [vmem:[%s198 + $0x24] sm:$0xf]
      %v218 = vld [vmem:[%s198 + $0x28] sm:$0xff]
      %v219 = vld [vmem:[%s198 + $0x30] sm:$0xff]
      %v220 = vld [vmem:[%s198 + $0x38] sm:$0xf]
      %v221 = vld [vmem:[%s198 + $0x3c] sm:$0xff]
      %v222 = vld [vmem:[%s198 + $0x44] sm:$0xff]
      %v223 = vld [vmem:[%s198 + $0x4c] sm:$0xf]
      %v224 = vld [vmem:[%s2] sm:$0xff]
      %226 = vset.pattern.permute.xlu0 0
      %227 = vperm.xlu0 %226, %v224
      %v228 = vpop.permute.xlu0 %227
      %v242 = vunpack.c.l.b16 %v212
      %v243 = vunpack.c.h.b16 %v212
      %v244 = vunpack.c.l.b16 %v213
      %v245 = vunpack.c.h.b16 %v213
      %v246 = vunpack.c.l.b16 %v214
      %v247 = vunpack.c.l.b16 %v215
      %v248 = vunpack.c.h.b16 %v215
      %v249 = vunpack.c.l.b16 %v216
      %v250 = vunpack.c.h.b16 %v216
      %v251 = vunpack.c.l.b16 %v217
      %v252 = vunpack.c.l.b16 %v218
      %v253 = vunpack.c.h.b16 %v218
      %v254 = vunpack.c.l.b16 %v219
      %v255 = vunpack.c.h.b16 %v219
      %v256 = vunpack.c.l.b16 %v220
      %v257 = vunpack.c.l.b16 %v221
      %v258 = vunpack.c.h.b16 %v221
      %v259 = vunpack.c.l.b16 %v222
      %v260 = vunpack.c.h.b16 %v222
      %v261 = vunpack.c.l.b16 %v223
      %v262 = vpack.c.b16 %v247, %v242
      %v263 = vpack.c.b16 %v248, %v243
      %v264 = vpack.c.b16 %v249, %v244
      %v265 = vpack.c.b16 %v250, %v245
      %v266 = vpack.c.b16 %v251, %v246
      %v267 = vpack.c.b16 %v257, %v252
      %v268 = vpack.c.b16 %v258, %v253
      %v269 = vpack.c.b16 %v259, %v254
      %v270 = vpack.c.b16 %v260, %v255
      %v271 = vpack.c.b16 %v261, %v256
      %vm282 = vcmask 261120
      %v284 = vsel %vm282, %v211, 0
      %286 = vmatpush.bf16.msra.mxu0 0
      %287 = vmatpush.bf16.msra.mxu0 0
      %288 = vmatpush.bf16.msra.mxu0 0
      %289 = vmatpush.bf16.msra.mxu0 0
      %290 = vmatpush.bf16.msra.mxu0 0
      %291 = vmatpush.bf16.msra.mxu0 0
      %292 = vmatpush.bf16.msra.mxu0 %v267
      %293 = vmatpush.bf16.msra.mxu0 %v262
      %294 = vmatmul.bf16.gmra.mxu0 %v284
      %v295 = vpop.f32.mrf.mxu0
      %v296 = vadd.f32 %v228, %v295
      %v297 = vpop.f32.mrf.mxu0
      %298 = vdwg.mxu0
      %299 = vmatpush.bf16.msra.mxu0 0
      %300 = vmatpush.bf16.msra.mxu0 0
      %301 = vmatpush.bf16.msra.mxu0 0
      %302 = vmatpush.bf16.msra.mxu0 0
      %303 = vmatpush.bf16.msra.mxu0 0
      %304 = vmatpush.bf16.msra.mxu0 0
      %305 = vmatpush.bf16.msra.mxu0 %v268
      %306 = vmatpush.bf16.msra.mxu0 %v263
      %307 = vmatmul.bf16.gmra.mxu0 %v284
      %v308 = vpop.f32.mrf.mxu0
      %v309 = vadd.f32 %v228, %v308
      %v310 = vpop.f32.mrf.mxu0
      %311 = vdwg.mxu0
      %312 = vmatpush.bf16.msra.mxu0 0
      %313 = vmatpush.bf16.msra.mxu0 0
      %314 = vmatpush.bf16.msra.mxu0 0
      %315 = vmatpush.bf16.msra.mxu0 0
      %316 = vmatpush.bf16.msra.mxu0 0
      %317 = vmatpush.bf16.msra.mxu0 0
      %318 = vmatpush.bf16.msra.mxu0 %v269
      %319 = vmatpush.bf16.msra.mxu0 %v264
      %320 = vmatmul.bf16.gmra.mxu0 %v284
      %v321 = vpop.f32.mrf.mxu0
      %v322 = vadd.f32 %v228, %v321
      %v323 = vpop.f32.mrf.mxu0
      %324 = vdwg.mxu0
      %325 = vmatpush.bf16.msra.mxu0 0
      %326 = vmatpush.bf16.msra.mxu0 0
      %327 = vmatpush.bf16.msra.mxu0 0
      %328 = vmatpush.bf16.msra.mxu0 0
      %329 = vmatpush.bf16.msra.mxu0 0
      %330 = vmatpush.bf16.msra.mxu0 0
      %331 = vmatpush.bf16.msra.mxu0 %v270
      %332 = vmatpush.bf16.msra.mxu0 %v265
      %333 = vmatmul.bf16.gmra.mxu0 %v284
      %v334 = vpop.f32.mrf.mxu0
      %v335 = vadd.f32 %v228, %v334
      %v336 = vpop.f32.mrf.mxu0
      %337 = vdwg.mxu0
      %338 = vmatpush.bf16.msra.mxu0 0
      %339 = vmatpush.bf16.msra.mxu0 0
      %340 = vmatpush.bf16.msra.mxu0 0
      %341 = vmatpush.bf16.msra.mxu0 0
      %342 = vmatpush.bf16.msra.mxu0 0
      %343 = vmatpush.bf16.msra.mxu0 0
      %344 = vmatpush.bf16.msra.mxu0 %v271
      %345 = vmatpush.bf16.msra.mxu0 %v266
      %346 = vmatmul.bf16.gmra.mxu0 %v284
      %v347 = vpop.f32.mrf.mxu0
      %v348 = vadd.f32 %v228, %v347
      %v349 = vpop.f32.mrf.mxu0
      %350 = vdwg.mxu0
      %v351 = vxor.u32 %v296, 2147483648
      %v352 = vxor.u32 %v309, 2147483648
      %v353 = vxor.u32 %v322, 2147483648
      %v354 = vxor.u32 %v335, 2147483648
      %v355 = vxor.u32 %v348, 2147483648
      %v356 = vmul.f32 %v351, 1.442695
      %v357 = vpow.pop %v356
      %v358 = vmul.f32 %v352, 1.442695
      %v359 = vpow.pop %v358
      %v360 = vmul.f32 %v353, 1.442695
      %v361 = vpow.pop %v360
      %v362 = vmul.f32 %v354, 1.442695
      %v363 = vpow.pop %v362
      %v364 = vmul.f32 %v355, 1.442695
      %v365 = vpow.pop %v364
      %v366 = vadd.f32 %v357, 1.0
      %v367 = vadd.f32 %v359, 1.0
      %v368 = vadd.f32 %v361, 1.0
      %v369 = vadd.f32 %v363, 1.0
      %v370 = vadd.f32 %v365, 1.0
      %v371 = vrcp.pop %v366
      %v372 = vmul.f32 %v366, %v371
      %v373 = vsub.f32 1.0, %v372
      %v374 = vmul.f32 %v371, %v373
      %v375 = vadd.f32 %v371, %v374
      %vm376 = vweird.f32 %v366
      %vm377 = vweird.f32 %v371
      %vm378 = vmor %vm376, %vm377
      %v379 = vsel %vm378, %v371, %v375
      %v380 = vand.u32 2147483647, %v366
      %vm381 = vcmp.eq.f32.partialorder %v380, 8.507059e+37
      %v382 = vand.u32 %v366, 2147483648
      %v383 = vor.u32 1.1754944e-38, %v382
      %v384 = vsel %vm381, %v383, %v379
      %v385 = vmul.f32 1.0, %v384
      %v386 = vrcp.pop %v367
      %v387 = vmul.f32 %v367, %v386
      %v388 = vsub.f32 1.0, %v387
      %v389 = vmul.f32 %v386, %v388
      %v390 = vadd.f32 %v386, %v389
      %vm391 = vweird.f32 %v367
      %vm392 = vweird.f32 %v386
      %vm393 = vmor %vm391, %vm392
      %v394 = vsel %vm393, %v386, %v390
      %v395 = vand.u32 2147483647, %v367
      %vm396 = vcmp.eq.f32.partialorder %v395, 8.507059e+37
      %v397 = vand.u32 %v367, 2147483648
      %v398 = vor.u32 1.1754944e-38, %v397
      %v399 = vsel %vm396, %v398, %v394
      %v400 = vmul.f32 1.0, %v399
      %v401 = vrcp.pop %v368
      %v402 = vmul.f32 %v368, %v401
      %v403 = vsub.f32 1.0, %v402
      %v404 = vmul.f32 %v401, %v403
      %v405 = vadd.f32 %v401, %v404
      %vm406 = vweird.f32 %v368
      %vm407 = vweird.f32 %v401
      %vm408 = vmor %vm406, %vm407
      %v409 = vsel %vm408, %v401, %v405
      %v410 = vand.u32 2147483647, %v368
      %vm411 = vcmp.eq.f32.partialorder %v410, 8.507059e+37
      %v412 = vand.u32 %v368, 2147483648
      %v413 = vor.u32 1.1754944e-38, %v412
      %v414 = vsel %vm411, %v413, %v409
      %v415 = vmul.f32 1.0, %v414
      %v416 = vrcp.pop %v369
      %v417 = vmul.f32 %v369, %v416
      %v418 = vsub.f32 1.0, %v417
      %v419 = vmul.f32 %v416, %v418
      %v420 = vadd.f32 %v416, %v419
      %vm421 = vweird.f32 %v369
      %vm422 = vweird.f32 %v416
      %vm423 = vmor %vm421, %vm422
      %v424 = vsel %vm423, %v416, %v420
      %v425 = vand.u32 2147483647, %v369
      %vm426 = vcmp.eq.f32.partialorder %v425, 8.507059e+37
      %v427 = vand.u32 %v369, 2147483648
      %v428 = vor.u32 1.1754944e-38, %v427
      %v429 = vsel %vm426, %v428, %v424
      %v430 = vmul.f32 1.0, %v429
      %v431 = vrcp.pop %v370
      %v432 = vmul.f32 %v370, %v431
      %v433 = vsub.f32 1.0, %v432
      %v434 = vmul.f32 %v431, %v433
      %v435 = vadd.f32 %v431, %v434
      %vm436 = vweird.f32 %v370
      %vm437 = vweird.f32 %v431
      %vm438 = vmor %vm436, %vm437
      %v439 = vsel %vm438, %v431, %v435
      %v440 = vand.u32 2147483647, %v370
      %vm441 = vcmp.eq.f32.partialorder %v440, 8.507059e+37
      %v442 = vand.u32 %v370, 2147483648
      %v443 = vor.u32 1.1754944e-38, %v442
      %v444 = vsel %vm441, %v443, %v439
      %v445 = vmul.f32 1.0, %v444
      %v446 = vmul.f32 %v296, %v385
      %v447 = vmul.f32 %v309, %v400
      %v448 = vmul.f32 %v322, %v415
      %v449 = vmul.f32 %v335, %v430
      %v450 = vmul.f32 %v348, %v445
      %451 = vst [vmem:[%s208] sm:$0xff] %v446
      %452 = vst [vmem:[%s208 + $0x8] sm:$0xff] %v447
      %453 = vst [vmem:[%s208 + $0x10] sm:$0xff] %v448
      %454 = vst [vmem:[%s208 + $0x18] sm:$0xff] %v449
      %vm455 = vcmask 523264
      %456 = vst.msk [vmem:[%s208 + $0x20] sm:$0xff] %vm455, %v450
      %s457 = smul.u32 5, %s19
      %p458 = scmp.lt.s32.totalorder %s18, 1
      %s459 = scalar_select %p458, %s18, 1
      %p460 = scmp.lt.s32.totalorder %s457, 4
      %s461 = scalar_select %p460, %s457, 4
      %s462 = smul.addr %s459, 5
      %s463 = sadd.s32 %s461, %s462
      %s464 = smul.addr %s463, 8
      %s465 = scalar_lea.vmem %s3, %s464
      // Predicated region
      $region33: #{my_model_forward.1} parent=31 // pred_check
        %p466 = pneg %p116
      $region34: #{my_model_forward.1} parent=31 // pred_check_branch
        %468 = sbr.rel (%p466) target = $region36
      $region35: #{my_model_forward.1} parent=31 // pred_region
        %s469 = smul.u32 5, %s19
      $region36: #{my_model_forward.1} parent=31 // pred_fallthru
        _
    $region32: #{my_model_forward.1} parent=5 // pred_fallthru
      _
    %p470 = scmp.le.s32.totalorder 2, %s9
    // Predicated region
    $region37: #{my_model_forward.1} parent=5 // pred_check
      %p471 = pneg %p470
    $region38: #{my_model_forward.1} parent=5 // pred_check_branch
      %473 = sbr.rel (%p471) target = $region40
    $region39: #{my_model_forward.1} parent=5 // pred_region
      %s474 = ssub.s32 %s9, 2
      // Predicated region
      $region41: #{my_model_forward.1} parent=39 // pred_check
        %p475 = pneg %p122
      $region42: #{my_model_forward.1} parent=39 // pred_check_branch
        %477 = sbr.rel (%p475) target = $region44
      $region43: #{my_model_forward.1} parent=39 // pred_region
        %s478 = smul.u32 5, %s21
        %p479 = scmp.lt.s32.totalorder %s20, 1
        %s480 = scalar_select %p479, %s20, 1
        %p481 = scmp.lt.s32.totalorder %s478, 4
        %s482 = scalar_select %p481, %s478, 4
        %s483 = smul.addr %s480, 5
        %s484 = sadd.s32 %s482, %s483
        %s485 = smul.addr %s484, 8
        %s486 = scalar_lea.vmem %s3, %s485
      $region44: #{my_model_forward.1} parent=39 // pred_fallthru
        _
    $region40: #{my_model_forward.1} parent=5 // pred_fallthru
      _
  $region6: #{my_model_forward.1} parent=0 // loop_footer
    %s13 = sadd.s32 1, %s9
  $region7: #{my_model_forward.1} parent=0 // loop_footer_branch
    %8 = sbr.rel target = $region3
  $region8: #{my_model_forward.1} parent=0 // loop_exit
    _

</llo_original>
